<compile_context>
chip_gen: v5e
topology: v5e:2x2
jax: 0.10.0
libtpu: 0.0.40
codegen_flags: <defaults>
</compile_context>

<pallas_src>
import functools

import jax
import jax.numpy as jnp
from jax.experimental import pallas as pl
from jax.experimental.pallas import tpu as pltpu

COEF = 0.97      # module default coefficient (flipped_filter = [-coef, 1.0])
_LANE = 128      # TPU lane width
_SUBLANE = 8     # TPU sublane count (f32)


def _round_up(x: int, m: int) -> int:
    return (x + m - 1) // m * m


def _round_down(x: int, m: int) -> int:
    return x // m * m


def _preemphasis_kernel(x_ref, halo_ref, o_ref, *, coef: float):
    """One (tr, tt) tile: y = x - coef * prev; halo supplies prev for column 0."""
    x = x_ref[...]                              # (tr, tt)
    prev = pltpu.roll(x, shift=1, axis=1)       # prev[:, t] = x[:, t-1]; col 0 is circular junk
    o_ref[...] = x - coef * prev                # lane-dense full-tile store
    # Column-0 fix-up: previous sample across the chunk boundary, or the
    # reflect value x[1] for the first chunk (delivered via the halo input).
    o_ref[:, 0:1] = x[:, 0:1] - coef * halo_ref[0]


def _preemphasis_2d(x2: jax.Array, halo3: jax.Array, tr: int, tt: int,
                    coef: float) -> jax.Array:
    """x2: (R, C) signal rows; halo3: (n_col_chunks, R, 1) previous-sample column."""
    R, C = x2.shape
    n_col_chunks = halo3.shape[0]
    grid = (pl.cdiv(R, tr), pl.cdiv(C, tt))
    assert grid[1] == n_col_chunks

    return pl.pallas_call(
        functools.partial(_preemphasis_kernel, coef=coef),
        out_shape=jax.ShapeDtypeStruct((R, C), x2.dtype),
        grid_spec=pltpu.PrefetchScalarGridSpec(
            num_scalar_prefetch=0,
            grid=grid,
            in_specs=[
                pl.BlockSpec((tr, tt), lambda i, j: (i, j)),        # signal tile
                pl.BlockSpec((1, tr, 1), lambda i, j: (j, i, 0)),   # halo column
            ],
            out_specs=pl.BlockSpec((tr, tt), lambda i, j: (i, j)),
        ),
        compiler_params=pltpu.CompilerParams(
            dimension_semantics=("parallel", "parallel"),   # all tiles independent
            vmem_limit_bytes=32 * 1024 * 1024,
        ),
        cost_estimate=pl.CostEstimate(
            flops=2 * R * C,
            transcendentals=0,
            bytes_accessed=8 * R * C + 4 * R * n_col_chunks,
        ),
    )(x2, halo3)


def _pick_row_tile(rows: int, row_tile: int, col_steps: int) -> int:
    """Row tile: multiple of 8 (or full rows if rows < 8); keep >= ~4 grid steps."""
    if rows <= _SUBLANE:
        return rows
    tr = min(row_tile, _round_down(rows, _SUBLANE))
    min_steps = 4
    if pl.cdiv(rows, tr) * col_steps < min_steps:
        tr = min(tr, max(_SUBLANE, _round_up(pl.cdiv(rows, min_steps), _SUBLANE)))
    return tr


@functools.partial(jax.jit, static_argnames=("coef", "row_tile", "lane_tile"))
def preemphasis(x: jax.Array, coef: float = COEF, *,
                row_tile: int = 512, lane_tile: int = 2048) -> jax.Array:
    """x: (B, 1, T) -> (B, 1, T) reflect-padded pre-emphasis (torch semantics)."""
    assert x.ndim == 3, "The number of dimensions of input tensor must be 3!"
    B, C, T = x.shape
    assert C == 1, "PreEmphasis conv1d expects in_channels == out_channels == 1"
    assert T >= 2, "reflect padding (1, 0) needs at least 2 samples"

    x2 = x.reshape(B, T)                         # free reshape

    # Path A candidate: a divisor of T that is a multiple of 128 (free fold).
    fold_tt = 0
    if T % _LANE == 0:
        start = _round_down(min(lane_tile, T), _LANE)
        for cand in range(start, _LANE - 1, -_LANE):
            if T % cand == 0:
                fold_tt = cand
                break
    use_fold = fold_tt > 0 and 4 * fold_tt >= min(lane_tile, T)

    if use_fold:
        # Fold time chunks into sublane rows: no pad, no output slice.
        tt = fold_tt
        n_chunks = T // tt
        rows = B * n_chunks
        xf = x2.reshape(rows, tt)                # free reshape (tt divides T)
        # Halo: previous sample of each row's column 0.
        reflect = xf[:, 1:2]                                   # first chunk: x[b, 1]
        prev_last = jnp.roll(xf[:, tt - 1:tt], 1, axis=0)      # else: prev chunk's last sample
        is_first = (jnp.arange(rows) % n_chunks) == 0
        halo3 = jnp.where(is_first[:, None], reflect, prev_last).reshape(1, rows, 1)
        tr = _pick_row_tile(rows, row_tile, 1)
        out2 = _preemphasis_2d(xf, halo3, tr, tt, coef)
    else:
        # Natural (B, T) layout, ragged last time block: no pad, no output slice.
        if T < _LANE:
            tt = T                               # full-dim block (tiny signals)
        else:
            tt = min(_round_down(lane_tile, _LANE), _round_down(T, _LANE))
        n_chunks = pl.cdiv(T, tt)
        chunk_ids = jnp.arange(n_chunks)
        # Halo column indices: reflect value x[1] for chunk 0, else x[c*tt - 1].
        cols = jnp.where(chunk_ids == 0, 1, chunk_ids * tt - 1)
        halo3 = jnp.transpose(x2[:, cols]).reshape(n_chunks, B, 1)
        tr = _pick_row_tile(B, row_tile, n_chunks)
        out2 = _preemphasis_2d(x2, halo3, tr, tt, coef)

    return out2.reshape(B, 1, T)                 # free reshape back


def _reference(x: jax.Array, coef: float = COEF) -> jax.Array:
    # Pure-JAX reference: reflect pad (1, 0) then correlate with [-coef, 1.0].
    xp = jnp.pad(x, ((0, 0), (0, 0), (1, 0)), mode="reflect")
    return xp[..., 1:] - coef * xp[..., :-1]


if __name__ == "__main__":
    key = jax.random.PRNGKey(0)
    cases = [
        (2, 1, 2560),   # T % 128 == 0 -> folded path (2 time chunks per batch)
        (2, 1, 2000),   # T % 128 != 0 -> ragged last time block (2 col chunks)
        (3, 1, 384),    # small multiple-of-128 case, single chunk
    ]
    for (B, C, T) in cases:
        key, sub = jax.random.split(key)
        x = jax.random.normal(sub, (B, C, T), dtype=jnp.float32)
        y = preemphasis(x)
        jax.block_until_ready(y)
        y_ref = _reference(x)
        assert y.shape == (B, C, T)
        err = float(jnp.max(jnp.abs(y - y_ref)))
        assert err < 1e-5, (B, C, T, err)
    print("KERNEL_OK")
</pallas_src>

<mosaic_0001>
module attributes {stable_mosaic.version = 11 : i64} {
  func.func @_preemphasis_kernel(%arg0: i32, %arg1: i32, %arg2: memref<4x1280xf32, #tpu.memory_space<vmem>>, %arg3: memref<1x4x1xf32, #tpu.memory_space<vmem>>, %arg4: memref<4x1280xf32, #tpu.memory_space<vmem>>) attributes {dimension_semantics = [#tpu.dimension_semantics<parallel>, #tpu.dimension_semantics<parallel>], iteration_bounds = array<i64: 1, 1>, scalar_prefetch = 0 : i64, scratch_operands = 0 : i64, tpu.core_type = #tpu.core_type<tc>, window_params = [{transform_indices = @transform_0, window_bounds = array<i64: 4, 1280>}, {transform_indices = @transform_1, window_bounds = array<i64: 1, 4, 1>}, {transform_indices = @transform_2, window_bounds = array<i64: 4, 1280>}]} {
    %c0 = arith.constant 0 : index
    %c0_0 = arith.constant 0 : index
    %0 = vector.load %arg2[%c0, %c0_0] : memref<4x1280xf32, #tpu.memory_space<vmem>>, vector<4x1280xf32>
    %c1_i32 = arith.constant 1 : i32
    %1 = tpu.dynamic_rotate %0 by %c1_i32 dim 1 : vector<4x1280xf32>, i32 -> vector<4x1280xf32>
    %cst = arith.constant 9.700000e-01 : f32
    %2 = vector.broadcast %cst : f32 to vector<4x1280xf32>
    %3 = arith.mulf %2, %1 : vector<4x1280xf32>
    %4 = arith.subf %0, %3 : vector<4x1280xf32>
    %c0_1 = arith.constant 0 : index
    %c0_2 = arith.constant 0 : index
    %5 = vector.load %arg4[%c0_1, %c0_2] : memref<4x1280xf32, #tpu.memory_space<vmem>>, vector<4x1280xf32>
    tpu.vector_store %arg4[%c0_1, %c0_2], %4 {strides = array<i32>} : memref<4x1280xf32, #tpu.memory_space<vmem>>, vector<4x1280xf32>,
    %6 = vector.extract_strided_slice %0 {offsets = [0, 0], sizes = [4, 1], strides = [1, 1]} : vector<4x1280xf32> to vector<4x1xf32>
    %c0_3 = arith.constant 0 : index
    %c0_4 = arith.constant 0 : index
    %c0_5 = arith.constant 0 : index
    %7 = vector.load %arg3[%c0_3, %c0_4, %c0_5] : memref<1x4x1xf32, #tpu.memory_space<vmem>>, vector<1x4x1xf32>
    %8 = vector.shape_cast %7 : vector<1x4x1xf32> to vector<4x1xf32>
    %cst_6 = arith.constant 9.700000e-01 : f32
    %9 = vector.broadcast %cst_6 : f32 to vector<4x1xf32>
    %10 = arith.mulf %9, %8 : vector<4x1xf32>
    %11 = arith.subf %6, %10 : vector<4x1xf32>
    %c0_7 = arith.constant 0 : index
    %c0_8 = arith.constant 0 : index
    %12 = vector.load %arg4[%c0_7, %c0_8] : memref<4x1280xf32, #tpu.memory_space<vmem>>, vector<4x1xf32>
    tpu.vector_store %arg4[%c0_7, %c0_8], %11 {strides = array<i32>} : memref<4x1280xf32, #tpu.memory_space<vmem>>, vector<4x1xf32>,
    return
  }
  func.func @transform_0(%arg0: i32, %arg1: i32) -> (i32, i32) {
    %c0_i32 = arith.constant 0 : i32
    return %arg0, %arg1 : i32, i32
  }
  func.func @transform_1(%arg0: i32, %arg1: i32) -> (i32, i32, i32) {
    %c0_i32 = arith.constant 0 : i32
    %c0_i32_0 = arith.constant 0 : i32
    return %arg1, %arg0, %c0_i32 : i32, i32, i32
  }
  func.func @transform_2(%arg0: i32, %arg1: i32) -> (i32, i32) {
    %c0_i32 = arith.constant 0 : i32
    return %arg0, %arg1 : i32, i32
  }
}

</mosaic_0001>

<llo_original>
// kernel: preemphasis.1
$region0: #{preemphasis.1}
  #allocation0 [shape = 'u32[]', space=smem, size = 0x4, offset = 0x4, fixed_abs, tag = 'smem constant byte address 0x4 - core index']
  #allocation1 [shape = 'u32[72,128]{1,0:T(1,128)}', space=vmem, size = 0x9000, scoped, tag = 'internal scratch']
  %s0 = inlined_call_operand.vmem [shape: f32[4,1280], index: 0, kind: input, shape index: {}]
  %s1 = inlined_call_operand.vmem [shape: f32[1,4,1], index: 1, kind: input, shape index: {}]
  %s2 = inlined_call_operand.vmem [shape: f32[4,1280], index: 2, kind: output, shape index: {}]
  %s3 = sld [smem:[#allocation0]]
  $region18: #{preemphasis.1} parent=0
    _
  %s5 = ssub.s32 1, %s3
  %s6 = scalar_select 0, %s5, %s3
  // Predicated region
  $region2: #{preemphasis.1} parent=0 // pred_check
    _
  $region3: #{preemphasis.1} parent=0 // pred_check_branch
    %8 = sbr.rel (0) target = $region5
  $region4: #{preemphasis.1} parent=0 // pred_region
    _
  $region5: #{preemphasis.1} parent=0 // pred_fallthru
    _
  // Predicated region
  $region6: #{preemphasis.1} parent=0 // pred_check
    _
  $region7: #{preemphasis.1} parent=0 // pred_check_branch
    %10 = sbr.rel (0) target = $region9
  $region8: #{preemphasis.1} parent=0 // pred_region
    _
  $region9: #{preemphasis.1} parent=0 // pred_fallthru
    _
  %v11 = vld [vmem:[%s0] sm:$0xff]
  %v12 = vld [vmem:[%s0 + $0x8] sm:$0xff]
  %v13 = vld [vmem:[%s0 + $0x10] sm:$0xff]
  %v14 = vld [vmem:[%s0 + $0x18] sm:$0xff]
  %v15 = vld [vmem:[%s0 + $0x20] sm:$0xff]
  %21 = vst [vmem:[#allocation1] ss:$2 sm:$0xff] %v11
  %s22 = scalar_lea.vmem [#allocation1], 16
  %23 = vst [vmem:[%s22] ss:$2 sm:$0xff] %v12
  %s24 = scalar_lea.vmem [#allocation1], 32
  %25 = vst [vmem:[%s24] ss:$2 sm:$0xff] %v13
  %s26 = scalar_lea.vmem [#allocation1], 48
  %27 = vst [vmem:[%s26] ss:$2 sm:$0xff] %v14
  %v28 = vld.sshfl [vmem:[#allocation1] sm:$0xff pattern:$0x75316420]
  %v29 = vld.sshfl [vmem:[#allocation1 + $0x8] sm:$0xff pattern:$0x75316420]
  %v30 = vld.sshfl [vmem:[#allocation1 + $0x10] sm:$0xff pattern:$0x75316420]
  %v31 = vld.sshfl [vmem:[#allocation1 + $0x18] sm:$0xff pattern:$0x75316420]
  %v32 = vld.sshfl [vmem:[#allocation1 + $0x20] sm:$0xff pattern:$0x75316420]
  %v33 = vld.sshfl [vmem:[#allocation1 + $0x28] sm:$0xff pattern:$0x75316420]
  %v34 = vld.sshfl [vmem:[#allocation1 + $0x30] sm:$0xff pattern:$0x75316420]
  %v35 = vld.sshfl [vmem:[#allocation1 + $0x38] sm:$0xff pattern:$0x75316420]
  %36 = vst [vmem:[#allocation1] ss:$2 sm:$0xff] %v15
  %v37 = vld.sshfl [vmem:[#allocation1] sm:$0xff pattern:$0x75316420]
  %v38 = vld.sshfl [vmem:[#allocation1 + $0x8] sm:$0xff pattern:$0x75316420]
  %49 = vrot.lane.b32.xlu0 %v28, 1
  %v50 = vpop.permute.xlu0 %49
  %51 = vrot.lane.b32.xlu0 %v29, 1
  %v52 = vpop.permute.xlu0 %51
  %53 = vrot.lane.b32.xlu0 %v30, 1
  %v54 = vpop.permute.xlu0 %53
  %55 = vrot.lane.b32.xlu0 %v31, 1
  %v56 = vpop.permute.xlu0 %55
  %57 = vrot.lane.b32.xlu0 %v32, 1
  %v58 = vpop.permute.xlu0 %57
  %59 = vrot.lane.b32.xlu0 %v33, 1
  %v60 = vpop.permute.xlu0 %59
  %61 = vrot.lane.b32.xlu0 %v34, 1
  %v62 = vpop.permute.xlu0 %61
  %63 = vrot.lane.b32.xlu0 %v35, 1
  %v64 = vpop.permute.xlu0 %63
  %65 = vrot.lane.b32.xlu0 %v37, 1
  %v66 = vpop.permute.xlu0 %65
  %67 = vrot.lane.b32.xlu0 %v38, 1
  %v68 = vpop.permute.xlu0 %67
  %v69 = vlaneseq
  %v70 = vand.u32 %v69, 127
  %vm71 = vcmp.lt.s32.totalorder %v70, 1
  %v72 = vsel %vm71, %v66, %v68
  %v73 = vsel %vm71, %v64, %v66
  %v74 = vsel %vm71, %v62, %v64
  %v75 = vsel %vm71, %v60, %v62
  %v76 = vsel %vm71, %v58, %v60
  %v77 = vsel %vm71, %v56, %v58
  %v78 = vsel %vm71, %v54, %v56
  %v79 = vsel %vm71, %v52, %v54
  %v80 = vsel %vm71, %v50, %v52
  %v81 = vsel %vm71, %v68, %v50
  %v82 = vmul.f32 %v81, 0.97
  %v83 = vmul.f32 %v80, 0.97
  %v84 = vmul.f32 %v79, 0.97
  %v85 = vmul.f32 %v78, 0.97
  %v86 = vmul.f32 %v77, 0.97
  %v87 = vmul.f32 %v76, 0.97
  %v88 = vmul.f32 %v75, 0.97
  %v89 = vmul.f32 %v74, 0.97
  %v90 = vmul.f32 %v73, 0.97
  %v91 = vmul.f32 %v72, 0.97
  %v102 = vrot.slane %v83, 4
  %v103 = vrot.slane %v85, 4
  %v104 = vrot.slane %v87, 4
  %v105 = vrot.slane %v89, 4
  %v106 = vrot.slane %v91, 4
  %vm107 = vcmask 1043456
  %v108 = vsel %vm107, %v82, %v102
  %v109 = vsel %vm107, %v84, %v103
  %v110 = vsel %vm107, %v86, %v104
  %v111 = vsel %vm107, %v88, %v105
  %v112 = vsel %vm107, %v90, %v106
  %v118 = vsub.f32 %v11, %v108
  %v119 = vsub.f32 %v12, %v109
  %v120 = vsub.f32 %v13, %v110
  %v121 = vsub.f32 %v14, %v111
  %v122 = vsub.f32 %v15, %v112
  %123 = vst [vmem:[%s2] sm:$0xff] %v118
  %124 = vst [vmem:[%s2 + $0x8] sm:$0xff] %v119
  %125 = vst [vmem:[%s2 + $0x10] sm:$0xff] %v120
  %126 = vst [vmem:[%s2 + $0x18] sm:$0xff] %v121
  %127 = vst [vmem:[%s2 + $0x20] sm:$0xff] %v122
  %v128 = vld [vmem:[%s1] sm:$0xf]
  %v129 = vmul.f32 %v128, 0.97
  %v130 = vsub.f32 %v11, %v129
  %vm131 = vcmask 3072
  %132 = vst.msk [vmem:[%s2] sm:$0xf] %vm131, %v130
  // Predicated region
  $region10: #{preemphasis.1} parent=0 // pred_check
    _
  $region11: #{preemphasis.1} parent=0 // pred_check_branch
    %134 = sbr.rel (0) target = $region13
  $region12: #{preemphasis.1} parent=0 // pred_region
    _
  $region13: #{preemphasis.1} parent=0 // pred_fallthru
    _
  // Predicated region
  $region14: #{preemphasis.1} parent=0 // pred_check
    _
  $region15: #{preemphasis.1} parent=0 // pred_check_branch
    %136 = sbr.rel (0) target = $region17
  $region16: #{preemphasis.1} parent=0 // pred_region
    _
  $region17: #{preemphasis.1} parent=0 // pred_fallthru
    _

</llo_original>
